<compile_context>
chip_gen: v7x
topology: tpu7x:2x2x1
jax: 0.10.0
libtpu: 0.0.40
codegen_flags: <defaults>
</compile_context>

<pallas_src>
import jax
import jax.numpy as jnp
from jax.experimental import pallas as pl
from jax.experimental.pallas import tpu as pltpu


_LANE = 128                       # feature dims padded to this (lane-dense)
_NODE_PAD = 256                   # node count padded to a multiple of this
_VMEM_LIMIT = 48 * 1024 * 1024    # safe on v7x (64 MiB phys) and v5e/v6e (128 MiB)


def _round_up(x, m):
    return ((x + m - 1) // m) * m


def _pick_row_tile(node_p):
    # Prefer large tiles, but keep >= 2 row blocks so both v7x TensorCores
    # get work from the "parallel" grid axis.  node_p is a multiple of 256,
    # so this always terminates (worst case t = 128 -> 2 blocks).
    for t in (512, 256, 128):
        if node_p % t == 0 and node_p // t >= 2:
            return t
    return 128


def _pick_k_tile(node_p):
    for t in (512, 256):
        if node_p % t == 0:
            return t
    return 256


# ---------------------------------------------------------------------------
# Fused kernel:  out = adj @ (x @ W) + bias
#   adj tile   : (tm, tk)  bf16, streamed from HBM exactly once
#   x tile     : (tk, Din_p) bf16, re-streamed once per row tile (small)
#   W          : (Din_p, Dout_p) bf16, VMEM-resident (constant block index)
#   bias row   : (1, Dout_p) f32, VMEM-resident
#   out        : (tm, Dout_p) f32, resident across the k axis (accumulator)
# ---------------------------------------------------------------------------
def _fused_gcn_kernel(a_ref, x_ref, w_ref, b_ref, o_ref):
    k = pl.program_id(1)

    # support tile for this k block, f32 accumulation on the MXU
    support = jnp.dot(x_ref[...], w_ref[...], preferred_element_type=jnp.float32)
    contrib = jnp.dot(a_ref[...], support.astype(jnp.bfloat16),
                      preferred_element_type=jnp.float32)

    @pl.when(k == 0)
    def _():
        # Fused bias + first partial sum: no separate zero-fill pass.
        o_ref[...] = contrib + b_ref[...]

    @pl.when(k > 0)
    def _():
        o_ref[...] += contrib


def gcn_forward_padded(a_p, x_p, w_p, b_p, *, tm, tk):
    """out = a_p @ (x_p @ w_p) + b_p on padded, lane-dense operands."""
    node_p, node_p2 = a_p.shape
    node_p3, din_p = x_p.shape
    din_p2, dout_p = w_p.shape
    assert node_p == node_p2 == node_p3 and din_p == din_p2
    assert node_p % tm == 0 and node_p % tk == 0

    n_row_tiles = node_p // tm
    cost = pl.CostEstimate(
        flops=2 * node_p * node_p * dout_p
        + 2 * n_row_tiles * node_p * din_p * dout_p,       # x@W recompute
        transcendentals=0,
        bytes_accessed=(a_p.size * 2                       # adj streamed once
                        + n_row_tiles * x_p.size * 2       # x re-streamed per row tile
                        + w_p.size * 2 + b_p.size * 4      # resident weight / bias
                        + node_p * dout_p * 4),            # f32 output writeback
    )

    return pl.pallas_call(
        _fused_gcn_kernel,
        out_shape=jax.ShapeDtypeStruct((node_p, dout_p), jnp.float32),
        grid_spec=pltpu.PrefetchScalarGridSpec(
            num_scalar_prefetch=0,
            grid=(node_p // tm, node_p // tk),
            in_specs=[
                pl.BlockSpec((tm, tk), lambda i, k: (i, k)),         # adj
                pl.BlockSpec((tk, din_p), lambda i, k: (k, 0)),      # x
                pl.BlockSpec((din_p, dout_p), lambda i, k: (0, 0)),  # W (resident)
                pl.BlockSpec((1, dout_p), lambda i, k: (0, 0)),      # bias row
            ],
            out_specs=pl.BlockSpec((tm, dout_p), lambda i, k: (i, 0)),
        ),
        compiler_params=pltpu.CompilerParams(
            dimension_semantics=("parallel", "arbitrary"),
            vmem_limit_bytes=_VMEM_LIMIT,
        ),
        cost_estimate=cost,
    )(a_p, x_p, w_p, b_p)


class GraphConvolutionPallas:
    """JAX/Pallas port of KEGLN GraphConvolution (eval-mode forward)."""

    def __init__(self, input_dim, output_dim, dropout=0.0, bias=False, key=None):
        if key is None:
            key = jax.random.PRNGKey(0)
        limit = float(jnp.sqrt(6.0 / (input_dim + output_dim)))
        self.input_dim = input_dim
        self.output_dim = output_dim
        self.din_p = _round_up(input_dim, _LANE)
        self.dout_p = _round_up(output_dim, _LANE)
        self.dropout_p = dropout  # identity in eval mode

        self.weight = jax.random.uniform(
            key, (input_dim, output_dim), dtype=jnp.float32,
            minval=-limit, maxval=limit)
        self.bias = jnp.zeros((output_dim,), jnp.float32) if bias else None
        self._refresh_padded_params()

    def _refresh_padded_params(self):
        # Pad/cast parameters ONCE (not on every forward call).
        self._w_p = jnp.zeros((self.din_p, self.dout_p), jnp.bfloat16).at[
            :self.input_dim, :self.output_dim].set(self.weight.astype(jnp.bfloat16))
        b = (self.bias if self.bias is not None
             else jnp.zeros((self.output_dim,), jnp.float32))
        self._b_p = jnp.zeros((1, self.dout_p), jnp.float32).at[
            0, :self.output_dim].set(b)

    def set_weight(self, weight):
        self.weight = jnp.asarray(weight, jnp.float32)
        self._refresh_padded_params()

    def set_bias(self, bias):
        self.bias = jnp.asarray(bias, jnp.float32)
        self._refresh_padded_params()

    @staticmethod
    def prepare_adj(adj):
        """Pad/cast the (reused) adjacency once; pass the result to __call__."""
        n = adj.shape[0]
        node_p = _round_up(n, _NODE_PAD)
        return jnp.zeros((node_p, node_p), jnp.bfloat16).at[:n, :n].set(
            adj.astype(jnp.bfloat16))

    def __call__(self, inputs, adj):
        n_nodes, din = inputs.shape
        assert din == self.input_dim
        node_p = _round_up(n_nodes, _NODE_PAD)

        # adj: accept either a pre-padded bf16 adjacency (preferred -- pad once
        # per graph via prepare_adj) or a raw (N, N) adjacency (padded here).
        if adj.shape == (node_p, node_p) and adj.dtype == jnp.bfloat16:
            a_p = adj
        else:
            assert adj.shape == (n_nodes, n_nodes)
            a_p = self.prepare_adj(adj)

        # Inputs are the only per-call pad/cast (N x Din, small vs N^2 adj).
        # Dropout == identity in eval mode.
        x_p = jnp.zeros((node_p, self.din_p), jnp.bfloat16).at[
            :n_nodes, :din].set(inputs.astype(jnp.bfloat16))

        tm = _pick_row_tile(node_p)
        tk = _pick_k_tile(node_p)
        out_p = gcn_forward_padded(a_p, x_p, self._w_p, self._b_p, tm=tm, tk=tk)
        return out_p[:n_nodes, :self.output_dim]


if __name__ == "__main__":
    num_nodes, input_dim, output_dim = 16, 32, 32

    key = jax.random.PRNGKey(0)
    k_x, k_a, k_w, k_b = jax.random.split(key, 4)

    x = jax.random.normal(k_x, (num_nodes, input_dim), dtype=jnp.float32)
    # Symmetric normalized-ish dense adjacency.
    a_raw = (jax.random.uniform(k_a, (num_nodes, num_nodes)) > 0.7).astype(
        jnp.float32)
    adj = a_raw + a_raw.T + jnp.eye(num_nodes, dtype=jnp.float32)
    deg = jnp.sum(adj, axis=1, keepdims=True)
    adj = adj / deg

    layer = GraphConvolutionPallas(input_dim, output_dim, dropout=0.0,
                                   bias=True, key=k_w)
    # Nonzero bias (as if loaded from a checkpoint) so the fused bias path is
    # exercised numerically; set_bias re-pads the cached parameter once.
    layer.set_bias(0.1 * jax.random.normal(k_b, (output_dim,), dtype=jnp.float32))

    # Pad/cast the adjacency exactly once (it is reused across layers/calls).
    adj_prepared = GraphConvolutionPallas.prepare_adj(adj)

    out = layer(x, adj_prepared)
    out = jax.block_until_ready(out)

    # Reference check (pure JAX, f32). Operands are bf16 in the kernel, so a
    # loose tolerance is expected.
    ref = adj @ (x @ layer.weight) + layer.bias
    assert out.shape == (num_nodes, output_dim)
    assert jnp.allclose(out, ref, atol=3e-2, rtol=3e-2), (
        float(jnp.max(jnp.abs(out - ref))))

    print("KERNEL_OK")
</pallas_src>

<mosaic_0001>
module attributes {stable_mosaic.version = 11 : i64} {
  func.func @_fused_gcn_kernel(%arg0: i32, %arg1: i32, %arg2: memref<128x256xbf16, #tpu.memory_space<vmem>>, %arg3: memref<256x128xbf16, #tpu.memory_space<vmem>>, %arg4: memref<128x128xbf16, #tpu.memory_space<vmem>>, %arg5: memref<1x128xf32, #tpu.memory_space<vmem>>, %arg6: memref<128x128xf32, #tpu.memory_space<vmem>>) attributes {dimension_semantics = [#tpu.dimension_semantics<parallel>, #tpu.dimension_semantics<arbitrary>], iteration_bounds = array<i64: 2, 1>, scalar_prefetch = 0 : i64, scratch_operands = 0 : i64, tpu.core_type = #tpu.core_type<tc>, window_params = [{transform_indices = @transform_0, window_bounds = array<i64: 128, 256>}, {transform_indices = @transform_1, window_bounds = array<i64: 256, 128>}, {pipeline_mode = #tpu.pipeline_mode<synchronous>, transform_indices = @transform_2, window_bounds = array<i64: 128, 128>}, {pipeline_mode = #tpu.pipeline_mode<synchronous>, transform_indices = @transform_3, window_bounds = array<i64: 1, 128>}, {transform_indices = @transform_4, window_bounds = array<i64: 128, 128>}]} {
    %c0 = arith.constant 0 : index
    %c0_0 = arith.constant 0 : index
    %0 = vector.load %arg3[%c0, %c0_0] : memref<256x128xbf16, #tpu.memory_space<vmem>>, vector<256x128xbf16>
    %c0_1 = arith.constant 0 : index
    %c0_2 = arith.constant 0 : index
    %1 = vector.load %arg4[%c0_1, %c0_2] : memref<128x128xbf16, #tpu.memory_space<vmem>>, vector<128x128xbf16>
    %cst = arith.constant dense<0.000000e+00> : vector<256x128xf32>
    %2 = tpu.matmul %0, %1, %cst {dimension_numbers = #tpu.dot_dimension_numbers<[1], [0], [0], [1], [0, 0, 1, 1], [], []>} : vector<256x128xbf16>, vector<128x128xbf16>, vector<256x128xf32> -> vector<256x128xf32>
    %c0_3 = arith.constant 0 : index
    %c0_4 = arith.constant 0 : index
    %3 = vector.load %arg2[%c0_3, %c0_4] : memref<128x256xbf16, #tpu.memory_space<vmem>>, vector<128x256xbf16>
    %4 = arith.truncf %2 : vector<256x128xf32> to vector<256x128xbf16>
    %cst_5 = arith.constant dense<0.000000e+00> : vector<128x128xf32>
    %5 = tpu.matmul %3, %4, %cst_5 {dimension_numbers = #tpu.dot_dimension_numbers<[1], [0], [0], [1], [0, 0, 1, 1], [], []>} : vector<128x256xbf16>, vector<256x128xbf16>, vector<128x128xf32> -> vector<128x128xf32>
    %c0_i32 = arith.constant 0 : i32
    %6 = arith.cmpi eq, %arg1, %c0_i32 : i32
    %7 = arith.extui %6 : i1 to i32
    %c0_i32_6 = arith.constant 0 : i32
    %8 = arith.cmpi ne, %7, %c0_i32_6 : i32
    scf.if %8 {
      %c0_9 = arith.constant 0 : index
      %c0_10 = arith.constant 0 : index
      %12 = vector.load %arg5[%c0_9, %c0_10] : memref<1x128xf32, #tpu.memory_space<vmem>>, vector<1x128xf32>
      %13 = vector.broadcast %12 : vector<1x128xf32> to vector<128x128xf32>
      %14 = arith.addf %5, %13 : vector<128x128xf32>
      %c0_11 = arith.constant 0 : index
      %c0_12 = arith.constant 0 : index
      %15 = vector.load %arg6[%c0_11, %c0_12] : memref<128x128xf32, #tpu.memory_space<vmem>>, vector<128x128xf32>
      tpu.vector_store %arg6[%c0_11, %c0_12], %14 {strides = array<i32>} : memref<128x128xf32, #tpu.memory_space<vmem>>, vector<128x128xf32>,
    } else {
    }
    %c0_i32_7 = arith.constant 0 : i32
    %9 = arith.cmpi sgt, %arg1, %c0_i32_7 : i32
    %10 = arith.extui %9 : i1 to i32
    %c0_i32_8 = arith.constant 0 : i32
    %11 = arith.cmpi ne, %10, %c0_i32_8 : i32
    scf.if %11 {
      %c0_9 = arith.constant 0 : index
      %c0_10 = arith.constant 0 : index
      %12 = vector.load %arg6[%c0_9, %c0_10] : memref<128x128xf32, #tpu.memory_space<vmem>>, vector<128x128xf32>
      %13 = arith.addf %12, %5 : vector<128x128xf32>
      %c0_11 = arith.constant 0 : index
      %c0_12 = arith.constant 0 : index
      %14 = vector.load %arg6[%c0_11, %c0_12] : memref<128x128xf32, #tpu.memory_space<vmem>>, vector<128x128xf32>
      tpu.vector_store %arg6[%c0_11, %c0_12], %13 {strides = array<i32>} : memref<128x128xf32, #tpu.memory_space<vmem>>, vector<128x128xf32>,
    } else {
    }
    return
  }
  func.func @transform_0(%arg0: i32, %arg1: i32) -> (i32, i32) {
    %c0_i32 = arith.constant 0 : i32
    return %arg0, %arg1 : i32, i32
  }
  func.func @transform_1(%arg0: i32, %arg1: i32) -> (i32, i32) {
    %c0_i32 = arith.constant 0 : i32
    %c0_i32_0 = arith.constant 0 : i32
    return %arg1, %c0_i32 : i32, i32
  }
  func.func @transform_2(%arg0: i32, %arg1: i32) -> (i32, i32) {
    %c0_i32 = arith.constant 0 : i32
    %c0_i32_0 = arith.constant 0 : i32
    %c0_i32_1 = arith.constant 0 : i32
    return %c0_i32, %c0_i32_0 : i32, i32
  }
  func.func @transform_3(%arg0: i32, %arg1: i32) -> (i32, i32) {
    %c0_i32 = arith.constant 0 : i32
    %c0_i32_0 = arith.constant 0 : i32
    %c0_i32_1 = arith.constant 0 : i32
    return %c0_i32, %c0_i32_0 : i32, i32
  }
  func.func @transform_4(%arg0: i32, %arg1: i32) -> (i32, i32) {
    %c0_i32 = arith.constant 0 : i32
    %c0_i32_0 = arith.constant 0 : i32
    return %arg0, %c0_i32 : i32, i32
  }
}

</mosaic_0001>

<llo_original>
// kernel: tpu_custom_call.1
$region0: #{tpu_custom_call.1}
  #allocation0 [shape = 'u32[]', space=smem, size = 0x4, offset = 0x4, fixed_abs, tag = 'smem constant byte address 0x4 - core index']
  #allocation1 [shape = 'u32[144,128]{1,0:T(1,128)}', space=vmem, size = 0x12000, scoped, tag = 'internal scratch']
  %s0 = inlined_call_operand.hbm [shape: bf16[256,256], index: 0, kind: input, shape index: {}]
  %s1 = inlined_call_operand.hbm [shape: bf16[256,128], index: 1, kind: input, shape index: {}]
  %s2 = inlined_call_operand.hbm [shape: bf16[128,128], index: 2, kind: input, shape index: {}]
  %s3 = inlined_call_operand.vmem [shape: f32[1,128], index: 3, kind: input, shape index: {}]
  %s4 = inlined_call_operand.hbm [shape: f32[256,128], index: 4, kind: output, shape index: {}]
  %s5 = sld [smem:[#allocation0]]
  $region69: #{tpu_custom_call.1} parent=0
    _
  %s7 = ssub.s32 1, %s5
  %s8 = scalar_select 0, %s7, %s5
  $region1: #{tpu_custom_call.1} parent=0
    #allocation2 [shape = 'u8[131072]{0}', space=vmem, size = 0x20000, scoped, tag = 'input window, operand 0']
    #allocation3 [shape = 's32[2]{0}', space=sflag, size = 0x8, scoped, tag = 'scoped memory for tpu_custom_call.1']
    #allocation4 [shape = 's32[2]{0}', space=sflag, size = 0x8, scoped, tag = 'scoped memory for tpu_custom_call.1']
    #allocation5 [shape = 'u8[65536]{0}', space=vmem, size = 0x10000, scoped, tag = 'input window, operand 1, single buffered']
    #allocation6 [shape = 's32[1]{0}', space=sflag, size = 0x4, scoped, tag = 'scoped memory for tpu_custom_call.1']
    #allocation7 [shape = 'u8[32768]{0}', space=vmem, size = 0x8000, scoped, tag = 'input window, operand 2, single buffered']
    #allocation8 [shape = 'u8[131072]{0}', space=vmem, size = 0x20000, scoped, tag = 'output window, operand 0']
    %9 = vsyncpa [#allocation3], 0
    %s10 = scalar_lea.sflag [#allocation3], 1
    %11 = vsyncpa %s10, 0
    %12 = vsyncpa [#allocation6], 0
    %13 = vsyncpa [#allocation4], 0
    %s14 = scalar_lea.sflag [#allocation4], 1
    %15 = vsyncpa %s14, 0
    loop: start=0, step=1, limit=4
    $region2: #{tpu_custom_call.1} parent=1 // loop_pre_header
      _
    $region3: #{tpu_custom_call.1} parent=1 // loop_header
      %s17 = sphi 0, %s21
      %p18 = scmp.ge.s32.totalorder %s17, 4
      %s24 = sphi 0, %s36
      %s25 = sphi 0, %s32
      %s26 = sphi 0, %s24
      %s27 = sphi 0, %s25
      %s28 = sphi 0, %s26
      %s29 = sphi 0, %s27
      %s41 = sphi 0, %s43
      %s44 = sphi 0, %s41
      %s45 = sphi 0, %s44
      %s61 = sphi 0, %s45
      %s67 = sphi 0, %s69
      %s70 = sphi 0, %s67
      %s71 = sphi 0, %s70
      %s87 = sphi 0, %s71
      %s91 = sphi 0, %s91
      %s93 = sphi 0, %s91
      %s94 = sphi 0, %s93
      %s108 = sphi 0, %s94
      %s112 = sphi 0, %s112
      %s114 = sphi 0, %s112
      %s115 = sphi 0, %s114
      %s129 = sphi 0, %s115
      %s135 = sphi 0, %s137
      %s138 = sphi 0, %s135
      %s139 = sphi 0, %s138
      %s155 = sphi 0, %s139
    $region4: #{tpu_custom_call.1} parent=1 // loop_header_branch
      %20 = sbr.rel (%p18) target = $region8
    $region5: #{tpu_custom_call.1} parent=1 // loop_body
      %s22 = ssub.s32 %s17, 1
      %s23 = ssub.s32 %s17, 2
      %s30 = sadd.s32 1, %s25
      %p31 = scmp.ge.s32.totalorder %s30, 1
      %s32 = scalar_select %p31, 0, %s30
      %s33 = sadd.s32 1, %s24
      %s34 = scalar_select %p31, %s33, %s24
      %p35 = scmp.ge.s32.totalorder %s34, 2
      %s36 = scalar_select %p35, 0, %s34
      %s37 = ssub.s32 %s24, %s36
      %s38 = ssub.s32 %s25, %s32
      %s39 = sor.u32 %s37, %s38
      %p40 = scmp.eq.s32.totalorder %s39, 0
      %s42 = sadd.s32 %s41, 1
      %s43 = scalar_select %p40, %s41, %s42
      %p46 = pneg %p40
      %p47 = scmp.eq.s32.totalorder %s17, 1
      %p48 = por %p46, %p47
      %p49 = scmp.ne.s32.totalorder %s41, %s44
      %p50 = scmp.eq.s32.totalorder %s17, 0
      %p51 = por %p49, %p50
      %p52 = scmp.ne.s32.totalorder %s41, %s44
      %p53 = scmp.eq.s32.totalorder %s22, 1
      %p54 = por %p52, %p53
      %p55 = scmp.ne.s32.totalorder %s44, %s45
      %p56 = scmp.eq.s32.totalorder %s22, 0
      %p57 = por %p55, %p56
      %p58 = scmp.ne.s32.totalorder %s44, %s45
      %p59 = scmp.eq.s32.totalorder %s23, 1
      %p60 = por %p58, %p59
      %p62 = scmp.ne.s32.totalorder %s45, %s61
      %p63 = scmp.eq.s32.totalorder %s23, 0
      %p64 = por %p62, %p63
      %s65 = ssub.s32 %s25, %s32
      %p66 = scmp.eq.s32.totalorder %s65, 0
      %s68 = sadd.s32 %s67, 1
      %s69 = scalar_select %p66, %s67, %s68
      %p72 = pneg %p66
      %p73 = scmp.eq.s32.totalorder %s17, 1
      %p74 = por %p72, %p73
      %p75 = scmp.ne.s32.totalorder %s67, %s70
      %p76 = scmp.eq.s32.totalorder %s17, 0
      %p77 = por %p75, %p76
      %p78 = scmp.ne.s32.totalorder %s67, %s70
      %p79 = scmp.eq.s32.totalorder %s22, 1
      %p80 = por %p78, %p79
      %p81 = scmp.ne.s32.totalorder %s70, %s71
      %p82 = scmp.eq.s32.totalorder %s22, 0
      %p83 = por %p81, %p82
      %p84 = scmp.ne.s32.totalorder %s70, %s71
      %p85 = scmp.eq.s32.totalorder %s23, 1
      %p86 = por %p84, %p85
      %p88 = scmp.ne.s32.totalorder %s71, %s87
      %p89 = scmp.eq.s32.totalorder %s23, 0
      %p90 = por %p88, %p89
      %s92 = sadd.s32 %s91, 1
      %p95 = scmp.eq.s32.totalorder %s17, 1
      %p96 = scmp.ne.s32.totalorder %s91, %s93
      %p97 = scmp.eq.s32.totalorder %s17, 0
      %p98 = por %p96, %p97
      %p99 = scmp.ne.s32.totalorder %s91, %s93
      %p100 = scmp.eq.s32.totalorder %s22, 1
      %p101 = por %p99, %p100
      %p102 = scmp.ne.s32.totalorder %s93, %s94
      %p103 = scmp.eq.s32.totalorder %s22, 0
      %p104 = por %p102, %p103
      %p105 = scmp.ne.s32.totalorder %s93, %s94
      %p106 = scmp.eq.s32.totalorder %s23, 1
      %p107 = por %p105, %p106
      %p109 = scmp.ne.s32.totalorder %s94, %s108
      %p110 = scmp.eq.s32.totalorder %s23, 0
      %p111 = por %p109, %p110
      %s113 = sadd.s32 %s112, 1
      %p116 = scmp.eq.s32.totalorder %s17, 1
      %p117 = scmp.ne.s32.totalorder %s112, %s114
      %p118 = scmp.eq.s32.totalorder %s17, 0
      %p119 = por %p117, %p118
      %p120 = scmp.ne.s32.totalorder %s112, %s114
      %p121 = scmp.eq.s32.totalorder %s22, 1
      %p122 = por %p120, %p121
      %p123 = scmp.ne.s32.totalorder %s114, %s115
      %p124 = scmp.eq.s32.totalorder %s22, 0
      %p125 = por %p123, %p124
      %p126 = scmp.ne.s32.totalorder %s114, %s115
      %p127 = scmp.eq.s32.totalorder %s23, 1
      %p128 = por %p126, %p127
      %p130 = scmp.ne.s32.totalorder %s115, %s129
      %p131 = scmp.eq.s32.totalorder %s23, 0
      %p132 = por %p130, %p131
      %s133 = ssub.s32 %s24, %s36
      %p134 = scmp.eq.s32.totalorder %s133, 0
      %s136 = sadd.s32 %s135, 1
      %s137 = scalar_select %p134, %s135, %s136
      %p140 = pneg %p134
      %p141 = scmp.eq.s32.totalorder %s17, 1
      %p142 = por %p140, %p141
      %p143 = scmp.ne.s32.totalorder %s135, %s138
      %p144 = scmp.eq.s32.totalorder %s17, 0
      %p145 = por %p143, %p144
      %p146 = scmp.ne.s32.totalorder %s135, %s138
      %p147 = scmp.eq.s32.totalorder %s22, 1
      %p148 = por %p146, %p147
      %p149 = scmp.ne.s32.totalorder %s138, %s139
      %p150 = scmp.eq.s32.totalorder %s22, 0
      %p151 = por %p149, %p150
      %p152 = scmp.ne.s32.totalorder %s138, %s139
      %p153 = scmp.eq.s32.totalorder %s23, 1
      %p154 = por %p152, %p153
      %p156 = scmp.ne.s32.totalorder %s139, %s155
      %p157 = scmp.eq.s32.totalorder %s23, 0
      %p158 = por %p156, %p157
      %p159 = scmp.le.s32.totalorder 1, %s17
      %p160 = scmp.lt.s32.totalorder %s17, 3
      %p161 = pnand %p159, %p160
      %p162 = pneg %p161
      // Predicated region
      $region9: #{tpu_custom_call.1} parent=5 // pred_check
        _
      $region10: #{tpu_custom_call.1} parent=5 // pred_check_branch
        %164 = sbr.rel (%p161) target = $region12
      $region11: #{tpu_custom_call.1} parent=5 // pred_region
        %s165 = ssub.s32 %s17, 1
        // Predicated region
        $region13: #{tpu_custom_call.1} parent=11 // pred_check
          %p166 = pneg %p83
        $region14: #{tpu_custom_call.1} parent=11 // pred_check_branch
          %168 = sbr.rel (%p166) target = $region16
        $region15: #{tpu_custom_call.1} parent=11 // pred_region
          %s169 = smul.u32 32, %s27
          %s171 = ssub.s32 2048, 2048
          %172 = vsyncadd [#allocation6], %s171
          %s173 = smul.addr %s169, 64
          %s174 = scalar_lea.hbm %s1, %s173
          %s175 = sshll.u32 [#allocation5], 4
          %s176 = int_to_ptr.vmem [resolvable:$true] %s175
          %181 = dma.hbm_to_vmem [thread:$0]  %s174, 2048, %s176, [#allocation6], 64, 64, 4
        $region16: #{tpu_custom_call.1} parent=11 // pred_fallthru
          _
        // Predicated region
        $region17: #{tpu_custom_call.1} parent=11 // pred_check
          %p182 = pneg %p104
        $region18: #{tpu_custom_call.1} parent=11 // pred_check_branch
          %184 = sbr.rel (%p182) target = $region20
        $region19: #{tpu_custom_call.1} parent=11 // pred_region
          %s186 = ssub.s32 1024, 1024
          %187 = vsyncadd [#allocation6], %s186
          %s188 = sshll.u32 [#allocation7], 4
          %s189 = int_to_ptr.vmem [resolvable:$true] %s188
          %194 = dma.hbm_to_vmem [thread:$0]  %s2, 1024, %s189, [#allocation6], 64, 64, 4
        $region20: #{tpu_custom_call.1} parent=11 // pred_fallthru
          _
        // Predicated region
        $region21: #{tpu_custom_call.1} parent=11 // pred_check
          %p195 = pneg %p125
        $region22: #{tpu_custom_call.1} parent=11 // pred_check_branch
          %197 = sbr.rel (%p195) target = $region24
        $region23: #{tpu_custom_call.1} parent=11 // pred_region
          _
        $region24: #{tpu_custom_call.1} parent=11 // pred_fallthru
          _
      $region12: #{tpu_custom_call.1} parent=5 // pred_fallthru
        _
      %p198 = scmp.lt.s32.totalorder %s17, 2
      // Predicated region
      $region25: #{tpu_custom_call.1} parent=5 // pred_check
        %p199 = pneg %p198
      $region26: #{tpu_custom_call.1} parent=5 // pred_check_branch
        %201 = sbr.rel (%p199) target = $region28
      $region27: #{tpu_custom_call.1} parent=5 // pred_region
        // Predicated region
        $region29: #{tpu_custom_call.1} parent=27 // pred_check
          %p202 = pneg %p51
        $region30: #{tpu_custom_call.1} parent=27 // pred_check_branch
          %204 = sbr.rel (%p202) target = $region32
        $region31: #{tpu_custom_call.1} parent=27 // pred_region
          %s205 = sand.u32 %s41, 1
          %s206 = scalar_lea.sflag [#allocation3], %s205
          %s207 = sand.u32 %s41, 1
          %s208 = smul.addr %s207, 128
          %s209 = scalar_lea.vmem [#allocation2], %s208
          %s210 = smul.u32 16, %s24
          %s211 = smul.u32 2, %s25
          %s213 = ssub.s32 2048, 2048
          %214 = vsyncadd %s206, %s213
          %s215 = smul.addr %s210, 2
          %s216 = sadd.s32 %s211, %s215
          %s217 = smul.addr %s216, 64
          %s218 = scalar_lea.hbm %s0, %s217
          %s219 = sshll.u32 %s209, 4
          %s220 = int_to_ptr.vmem [resolvable:$true] %s219
          %225 = dma.hbm_to_vmem [thread:$0]  %s218, 2048, %s220, %s206, 128, 128, 8
        $region32: #{tpu_custom_call.1} parent=27 // pred_fallthru
          _
      $region28: #{tpu_custom_call.1} parent=5 // pred_fallthru
        _
      %p226 = scmp.le.s32.totalorder 1, %s17
      %p227 = scmp.lt.s32.totalorder %s17, 3
      %p228 = pnand %p226, %p227
      %p229 = pneg %p228
      // Predicated region
      $region33: #{tpu_custom_call.1} parent=5 // pred_check
        _
      $region34: #{tpu_custom_call.1} parent=5 // pred_check_branch
        %231 = sbr.rel (%p228) target = $region36
      $region35: #{tpu_custom_call.1} parent=5 // pred_region
        %s232 = ssub.s32 %s17, 1
        %s233 = sand.u32 %s44, 1
        %s234 = scalar_lea.sflag [#allocation3], %s233
        %s235 = sand.u32 %s44, 1
        %s236 = smul.addr %s235, 128
        %s237 = scalar_lea.vmem [#allocation2], %s236
        // Predicated region
        $region37: #{tpu_custom_call.1} parent=35 // pred_check
          %p238 = pneg %p57
        $region38: #{tpu_custom_call.1} parent=35 // pred_check_branch
          %240 = sbr.rel (%p238) target = $region40
        $region39: #{tpu_custom_call.1} parent=35 // pred_region
          %241 = dma.done %s234, 2048
        $region40: #{tpu_custom_call.1} parent=35 // pred_fallthru
          _
        // Predicated region
        $region41: #{tpu_custom_call.1} parent=35 // pred_check
          %p242 = pneg %p83
        $region42: #{tpu_custom_call.1} parent=35 // pred_check_branch
          %244 = sbr.rel (%p242) target = $region44
        $region43: #{tpu_custom_call.1} parent=35 // pred_region
          %245 = dma.done [#allocation6], 2048
        $region44: #{tpu_custom_call.1} parent=35 // pred_fallthru
          _
        // Predicated region
        $region45: #{tpu_custom_call.1} parent=35 // pred_check
          %p246 = pneg %p104
        $region46: #{tpu_custom_call.1} parent=35 // pred_check_branch
          %248 = sbr.rel (%p246) target = $region48
        $region47: #{tpu_custom_call.1} parent=35 // pred_region
          %249 = dma.done [#allocation6], 1024
        $region48: #{tpu_custom_call.1} parent=35 // pred_fallthru
          _
        %s250 = sand.u32 %s44, 1
        %s251 = scalar_lea.sflag [#allocation3], %s250
        %s252 = sand.u32 %s44, 1
        %s253 = smul.addr %s252, 128
        %s254 = scalar_lea.vmem [#allocation2], %s253
        %p255 = pneg %p57
        %p256 = pneg %p54
        %p257 = pneg %p83
        %p258 = pneg %p80
        %p259 = pneg %p104
        %p260 = pneg %p101
        %p261 = pneg %p125
        %p262 = pneg %p122
        %p263 = pneg %p151
        %p264 = pneg %p148
        %s265 = sand.u32 %s138, 1
        %s266 = scalar_lea.sflag [#allocation4], %s265
        %s267 = sand.u32 %s138, 1
        %s268 = smul.addr %s267, 128
        %s269 = scalar_lea.vmem [#allocation8], %s268
        %s270 = smul.u32 16, %s26
        %s271 = smul.u32 2, %s27
        %s272 = smul.u32 32, %s27
        %s273 = smul.u32 16, %s26
        %v275 = vld [vmem:[#allocation5] sm:$0xf]
        %v276 = vld [vmem:[#allocation5 + $0x4] sm:$0xf]
        %v277 = vld [vmem:[#allocation5 + $0x8] sm:$0xf]
        %v278 = vld [vmem:[#allocation5 + $0xc] sm:$0xf]
        %v279 = vld [vmem:[#allocation5 + $0x10] sm:$0xf]
        %v280 = vld [vmem:[#allocation5 + $0x14] sm:$0xf]
        %v281 = vld [vmem:[#allocation5 + $0x18] sm:$0xf]
        %v282 = vld [vmem:[#allocation5 + $0x1c] sm:$0xf]
        %v283 = vld [vmem:[#allocation5 + $0x20] sm:$0xf]
        %v284 = vld [vmem:[#allocation5 + $0x24] sm:$0xf]
        %v285 = vld [vmem:[#allocation5 + $0x28] sm:$0xf]
        %v286 = vld [vmem:[#allocation5 + $0x2c] sm:$0xf]
        %v287 = vld [vmem:[#allocation5 + $0x30] sm:$0xf]
        %v288 = vld [vmem:[#allocation5 + $0x34] sm:$0xf]
        %v289 = vld [vmem:[#allocation5 + $0x38] sm:$0xf]
        %v290 = vld [vmem:[#allocation5 + $0x3c] sm:$0xf]
        %v291 = vld [vmem:[#allocation5 + $0x40] sm:$0xf]
        %v292 = vld [vmem:[#allocation5 + $0x44] sm:$0xf]
        %v293 = vld [vmem:[#allocation5 + $0x48] sm:$0xf]
        %v294 = vld [vmem:[#allocation5 + $0x4c] sm:$0xf]
        %v295 = vld [vmem:[#allocation5 + $0x50] sm:$0xf]
        %v296 = vld [vmem:[#allocation5 + $0x54] sm:$0xf]
        %v297 = vld [vmem:[#allocation5 + $0x58] sm:$0xf]
        %v298 = vld [vmem:[#allocation5 + $0x5c] sm:$0xf]
        %v299 = vld [vmem:[#allocation5 + $0x60] sm:$0xf]
        %v300 = vld [vmem:[#allocation5 + $0x64] sm:$0xf]
        %v301 = vld [vmem:[#allocation5 + $0x68] sm:$0xf]
        %v302 = vld [vmem:[#allocation5 + $0x6c] sm:$0xf]
        %v303 = vld [vmem:[#allocation5 + $0x70] sm:$0xf]
        %v304 = vld [vmem:[#allocation5 + $0x74] sm:$0xf]
        %v305 = vld [vmem:[#allocation5 + $0x78] sm:$0xf]
        %v306 = vld [vmem:[#allocation5 + $0x7c] sm:$0xf]
        %v307 = vld [vmem:[#allocation7] sm:$0xf]
        %v308 = vld [vmem:[#allocation7 + $0x4] sm:$0xf]
        %v309 = vld [vmem:[#allocation7 + $0x8] sm:$0xf]
        %v310 = vld [vmem:[#allocation7 + $0xc] sm:$0xf]
        %v311 = vld [vmem:[#allocation7 + $0x10] sm:$0xf]
        %v312 = vld [vmem:[#allocation7 + $0x14] sm:$0xf]
        %v313 = vld [vmem:[#allocation7 + $0x18] sm:$0xf]
        %v314 = vld [vmem:[#allocation7 + $0x1c] sm:$0xf]
        %v315 = vld [vmem:[#allocation7 + $0x20] sm:$0xf]
        %v316 = vld [vmem:[#allocation7 + $0x24] sm:$0xf]
        %v317 = vld [vmem:[#allocation7 + $0x28] sm:$0xf]
        %v318 = vld [vmem:[#allocation7 + $0x2c] sm:$0xf]
        %v319 = vld [vmem:[#allocation7 + $0x30] sm:$0xf]
        %v320 = vld [vmem:[#allocation7 + $0x34] sm:$0xf]
        %v321 = vld [vmem:[#allocation7 + $0x38] sm:$0xf]
        %v322 = vld [vmem:[#allocation7 + $0x3c] sm:$0xf]
        %v355 = vunpack.c.l.b16 %v275
        %v356 = vunpack.c.l.b16 %v276
        %v357 = vunpack.c.l.b16 %v277
        %v358 = vunpack.c.l.b16 %v278
        %v359 = vunpack.c.l.b16 %v279
        %v360 = vunpack.c.l.b16 %v280
        %v361 = vunpack.c.l.b16 %v281
        %v362 = vunpack.c.l.b16 %v282
        %v363 = vunpack.c.l.b16 %v283
        %v364 = vunpack.c.l.b16 %v284
        %v365 = vunpack.c.l.b16 %v285
        %v366 = vunpack.c.l.b16 %v286
        %v367 = vunpack.c.l.b16 %v287
        %v368 = vunpack.c.l.b16 %v288
        %v369 = vunpack.c.l.b16 %v289
        %v370 = vunpack.c.l.b16 %v290
        %v371 = vunpack.c.l.b16 %v291
        %v372 = vunpack.c.l.b16 %v292
        %v373 = vunpack.c.l.b16 %v293
        %v374 = vunpack.c.l.b16 %v294
        %v375 = vunpack.c.l.b16 %v295
        %v376 = vunpack.c.l.b16 %v296
        %v377 = vunpack.c.l.b16 %v297
        %v378 = vunpack.c.l.b16 %v298
        %v379 = vunpack.c.l.b16 %v299
        %v380 = vunpack.c.l.b16 %v300
        %v381 = vunpack.c.l.b16 %v301
        %v382 = vunpack.c.l.b16 %v302
        %v383 = vunpack.c.l.b16 %v303
        %v384 = vunpack.c.l.b16 %v304
        %v385 = vunpack.c.l.b16 %v305
        %v386 = vunpack.c.l.b16 %v306
        %v387 = vpack.c.b16 %v356, %v355
        %v388 = vpack.c.b16 %v358, %v357
        %v389 = vpack.c.b16 %v360, %v359
        %v390 = vpack.c.b16 %v362, %v361
        %v391 = vpack.c.b16 %v364, %v363
        %v392 = vpack.c.b16 %v366, %v365
        %v393 = vpack.c.b16 %v368, %v367
        %v394 = vpack.c.b16 %v370, %v369
        %v395 = vpack.c.b16 %v372, %v371
        %v396 = vpack.c.b16 %v374, %v373
        %v397 = vpack.c.b16 %v376, %v375
        %v398 = vpack.c.b16 %v378, %v377
        %v399 = vpack.c.b16 %v380, %v379
        %v400 = vpack.c.b16 %v382, %v381
        %v401 = vpack.c.b16 %v384, %v383
        %v402 = vpack.c.b16 %v386, %v385
        %v435 = vunpack.c.l.b16 %v307
        %v436 = vunpack.c.l.b16 %v308
        %v437 = vunpack.c.l.b16 %v309
        %v438 = vunpack.c.l.b16 %v310
        %v439 = vunpack.c.l.b16 %v311
        %v440 = vunpack.c.l.b16 %v312
        %v441 = vunpack.c.l.b16 %v313
        %v442 = vunpack.c.l.b16 %v314
        %v443 = vunpack.c.l.b16 %v315
        %v444 = vunpack.c.l.b16 %v316
        %v445 = vunpack.c.l.b16 %v317
        %v446 = vunpack.c.l.b16 %v318
        %v447 = vunpack.c.l.b16 %v319
        %v448 = vunpack.c.l.b16 %v320
        %v449 = vunpack.c.l.b16 %v321
        %v450 = vunpack.c.l.b16 %v322
        %v451 = vpack.c.b16 %v436, %v435
        %v452 = vpack.c.b16 %v438, %v437
        %v453 = vpack.c.b16 %v440, %v439
        %v454 = vpack.c.b16 %v442, %v441
        %v455 = vpack.c.b16 %v444, %v443
        %v456 = vpack.c.b16 %v446, %v445
        %v457 = vpack.c.b16 %v448, %v447
        %v458 = vpack.c.b16 %v450, %v449
        %467 = vmatprep.subr.bf16.mxu0 0
        %468 = vmatpush1.bf16.msra.mxu0 %v451
        %469 = vmatprep.subr.bf16.mxu0 0
        %470 = vmatpush1.bf16.msra.mxu0 %v452
        %471 = vmatprep.subr.bf16.mxu0 0
        %472 = vmatpush1.bf16.msra.mxu0 %v453
        %473 = vmatprep.subr.bf16.mxu0 0
        %474 = vmatpush1.bf16.msra.mxu0 %v454
        %475 = vmatprep.subr.bf16.mxu0 0
        %476 = vmatpush1.bf16.msra.mxu0 %v455
        %477 = vmatprep.subr.bf16.mxu0 0
        %478 = vmatpush1.bf16.msra.mxu0 %v456
        %479 = vmatprep.subr.bf16.mxu0 0
        %480 = vmatpush1.bf16.msra.mxu0 %v457
        %481 = vmatprep.subr.bf16.mxu0 0
        %482 = vmatpush1.bf16.msra.mxu0 %v458
        %483 = vmatprep.subr.bf16.mxu0 0
        %484 = vmatpush1.bf16.msra.mxu0 0
        %485 = vmatprep.subr.bf16.mxu0 0
        %486 = vmatpush1.bf16.msra.mxu0 0
        %487 = vmatprep.subr.bf16.mxu0 0
        %488 = vmatpush1.bf16.msra.mxu0 0
        %489 = vmatprep.subr.bf16.mxu0 0
        %490 = vmatpush1.bf16.msra.mxu0 0
        %491 = vmatprep.subr.bf16.mxu0 0
        %492 = vmatpush1.bf16.msra.mxu0 0
        %493 = vmatprep.subr.bf16.mxu0 0
        %494 = vmatpush1.bf16.msra.mxu0 0
        %495 = vmatprep.subr.bf16.mxu0 0
        %496 = vmatpush1.bf16.msra.mxu0 0
        %497 = vmatprep.subr.bf16.mxu0 0
        %498 = vmatpush1.bf16.msra.mxu0 0
        %499 = vmatprep.mubr.bf16.mxu0 0
        %500 = vmatmul.mubr.bf16.gmra.mrb[0].mxu0 %v387
        %v501 = vpop.f32.mrb[0].mxu0
        %v502 = vadd.f32 0.0, %v501
        %v503 = vpop.f32.mrb[0].mxu0
        %v504 = vpop.f32.mrb[0].mxu0
        %v505 = vadd.f32 0.0, %v504
        %v506 = vpop.f32.mrb[0].mxu0
        %507 = vmatprep.mubr.bf16.mxu0 0
        %508 = vmatmul.mubr.bf16.gmra.mrb[0].mxu0 %v388
        %v509 = vpop.f32.mrb[0].mxu0
        %v510 = vadd.f32 0.0, %v509
        %v511 = vpop.f32.mrb[0].mxu0
        %v512 = vpop.f32.mrb[0].mxu0
        %v513 = vadd.f32 0.0, %v512
        %v514 = vpop.f32.mrb[0].mxu0
        %515 = vmatprep.mubr.bf16.mxu0 0
        %516 = vmatmul.mubr.bf16.gmra.mrb[0].mxu0 %v389
        %v517 = vpop.f32.mrb[0].mxu0
        %v518 = vadd.f32 0.0, %v517
        %v519 = vpop.f32.mrb[0].mxu0
        %v520 = vpop.f32.mrb[0].mxu0
        %v521 = vadd.f32 0.0, %v520
        %v522 = vpop.f32.mrb[0].mxu0
        %523 = vmatprep.mubr.bf16.mxu0 0
        %524 = vmatmul.mubr.bf16.gmra.mrb[0].mxu0 %v390
        %v525 = vpop.f32.mrb[0].mxu0
        %v526 = vadd.f32 0.0, %v525
        %v527 = vpop.f32.mrb[0].mxu0
        %v528 = vpop.f32.mrb[0].mxu0
        %v529 = vadd.f32 0.0, %v528
        %v530 = vpop.f32.mrb[0].mxu0
        %531 = vmatprep.mubr.bf16.mxu0 0
        %532 = vmatmul.mubr.bf16.gmra.mrb[0].mxu0 %v391
        %v533 = vpop.f32.mrb[0].mxu0
        %v534 = vadd.f32 0.0, %v533
        %v535 = vpop.f32.mrb[0].mxu0
        %v536 = vpop.f32.mrb[0].mxu0
        %v537 = vadd.f32 0.0, %v536
        %v538 = vpop.f32.mrb[0].mxu0
        %539 = vmatprep.mubr.bf16.mxu0 0
        %540 = vmatmul.mubr.bf16.gmra.mrb[0].mxu0 %v392
        %v541 = vpop.f32.mrb[0].mxu0
        %v542 = vadd.f32 0.0, %v541
        %v543 = vpop.f32.mrb[0].mxu0
        %v544 = vpop.f32.mrb[0].mxu0
        %v545 = vadd.f32 0.0, %v544
        %v546 = vpop.f32.mrb[0].mxu0
        %547 = vmatprep.mubr.bf16.mxu0 0
        %548 = vmatmul.mubr.bf16.gmra.mrb[0].mxu0 %v393
        %v549 = vpop.f32.mrb[0].mxu0
        %v550 = vadd.f32 0.0, %v549
        %v551 = vpop.f32.mrb[0].mxu0
        %v552 = vpop.f32.mrb[0].mxu0
        %v553 = vadd.f32 0.0, %v552
        %v554 = vpop.f32.mrb[0].mxu0
        %555 = vmatprep.mubr.bf16.mxu0 0
        %556 = vmatmul.mubr.bf16.gmra.mrb[0].mxu0 %v394
        %v557 = vpop.f32.mrb[0].mxu0
        %v558 = vadd.f32 0.0, %v557
        %v559 = vpop.f32.mrb[0].mxu0
        %v560 = vpop.f32.mrb[0].mxu0
        %v561 = vadd.f32 0.0, %v560
        %v562 = vpop.f32.mrb[0].mxu0
        %563 = vmatprep.mubr.bf16.mxu0 0
        %564 = vmatmul.mubr.bf16.gmra.mrb[0].mxu0 %v395
        %v565 = vpop.f32.mrb[0].mxu0
        %v566 = vadd.f32 0.0, %v565
        %v567 = vpop.f32.mrb[0].mxu0
        %v568 = vpop.f32.mrb[0].mxu0
        %v569 = vadd.f32 0.0, %v568
        %v570 = vpop.f32.mrb[0].mxu0
        %571 = vmatprep.mubr.bf16.mxu0 0
        %572 = vmatmul.mubr.bf16.gmra.mrb[0].mxu0 %v396
        %v573 = vpop.f32.mrb[0].mxu0
        %v574 = vadd.f32 0.0, %v573
        %v575 = vpop.f32.mrb[0].mxu0
        %v576 = vpop.f32.mrb[0].mxu0
        %v577 = vadd.f32 0.0, %v576
        %v578 = vpop.f32.mrb[0].mxu0
        %579 = vmatprep.mubr.bf16.mxu0 0
        %580 = vmatmul.mubr.bf16.gmra.mrb[0].mxu0 %v397
        %v581 = vpop.f32.mrb[0].mxu0
        %v582 = vadd.f32 0.0, %v581
        %v583 = vpop.f32.mrb[0].mxu0
        %v584 = vpop.f32.mrb[0].mxu0
        %v585 = vadd.f32 0.0, %v584
        %v586 = vpop.f32.mrb[0].mxu0
        %587 = vmatprep.mubr.bf16.mxu0 0
        %588 = vmatmul.mubr.bf16.gmra.mrb[0].mxu0 %v398
        %v589 = vpop.f32.mrb[0].mxu0
        %v590 = vadd.f32 0.0, %v589
        %v591 = vpop.f32.mrb[0].mxu0
        %v592 = vpop.f32.mrb[0].mxu0
        %v593 = vadd.f32 0.0, %v592
        %v594 = vpop.f32.mrb[0].mxu0
        %595 = vmatprep.mubr.bf16.mxu0 0
        %596 = vmatmul.mubr.bf16.gmra.mrb[0].mxu0 %v399
        %v597 = vpop.f32.mrb[0].mxu0
        %v598 = vadd.f32 0.0, %v597
        %v599 = vpop.f32.mrb[0].mxu0
        %v600 = vpop.f32.mrb[0].mxu0
        %v601 = vadd.f32 0.0, %v600
        %v602 = vpop.f32.mrb[0].mxu0
        %603 = vmatprep.mubr.bf16.mxu0 0
        %604 = vmatmul.mubr.bf16.gmra.mrb[0].mxu0 %v400
        %v605 = vpop.f32.mrb[0].mxu0
        %v606 = vadd.f32 0.0, %v605
        %v607 = vpop.f32.mrb[0].mxu0
        %v608 = vpop.f32.mrb[0].mxu0
        %v609 = vadd.f32 0.0, %v608
        %v610 = vpop.f32.mrb[0].mxu0
        %611 = vmatprep.mubr.bf16.mxu0 0
        %612 = vmatmul.mubr.bf16.gmra.mrb[0].mxu0 %v401
        %v613 = vpop.f32.mrb[0].mxu0
        %v614 = vadd.f32 0.0, %v613
        %v615 = vpop.f32.mrb[0].mxu0
        %v616 = vpop.f32.mrb[0].mxu0
        %v617 = vadd.f32 0.0, %v616
        %v618 = vpop.f32.mrb[0].mxu0
        %619 = vmatprep.mubr.bf16.mxu0 0
        %620 = vmatmul.mubr.bf16.gmra.mrb[0].mxu0 %v402
        %v621 = vpop.f32.mrb[0].mxu0
        %v622 = vadd.f32 0.0, %v621
        %v623 = vpop.f32.mrb[0].mxu0
        %v624 = vpop.f32.mrb[0].mxu0
        %v625 = vadd.f32 0.0, %v624
        %v626 = vpop.f32.mrb[0].mxu0
        %627 = vdwg.mxu0
        %v628 = vld [vmem:[%s237] sm:$0xff]
        %v629 = vld [vmem:[%s237 + $0x8] sm:$0xff]
        %v630 = vld [vmem:[%s237 + $0x10] sm:$0xff]
        %v631 = vld [vmem:[%s237 + $0x18] sm:$0xff]
        %v632 = vld [vmem:[%s237 + $0x20] sm:$0xff]
        %v633 = vld [vmem:[%s237 + $0x28] sm:$0xff]
        %v634 = vld [vmem:[%s237 + $0x30] sm:$0xff]
        %v635 = vld [vmem:[%s237 + $0x38] sm:$0xff]
        %v636 = vld [vmem:[%s237 + $0x40] sm:$0xff]
        %v637 = vld [vmem:[%s237 + $0x48] sm:$0xff]
        %v638 = vld [vmem:[%s237 + $0x50] sm:$0xff]
        %v639 = vld [vmem:[%s237 + $0x58] sm:$0xff]
        %v640 = vld [vmem:[%s237 + $0x60] sm:$0xff]
        %v641 = vld [vmem:[%s237 + $0x68] sm:$0xff]
        %v642 = vld [vmem:[%s237 + $0x70] sm:$0xff]
        %v643 = vld [vmem:[%s237 + $0x78] sm:$0xff]
        %v644 = vpack.c.bf16 %v505, %v502
        %v645 = vpack.c.bf16 %v513, %v510
        %v646 = vpack.c.bf16 %v521, %v518
        %v647 = vpack.c.bf16 %v529, %v526
        %v648 = vpack.c.bf16 %v537, %v534
        %v649 = vpack.c.bf16 %v545, %v542
        %v650 = vpack.c.bf16 %v553, %v550
        %v651 = vpack.c.bf16 %v561, %v558
        %v652 = vpack.c.bf16 %v569, %v566
        %v653 = vpack.c.bf16 %v577, %v574
        %v654 = vpack.c.bf16 %v585, %v582
        %v655 = vpack.c.bf16 %v593, %v590
        %v656 = vpack.c.bf16 %v601, %v598
        %v657 = vpack.c.bf16 %v609, %v606
        %v658 = vpack.c.bf16 %v617, %v614
        %v659 = vpack.c.bf16 %v625, %v622
        %v676 = vunpack.c.l.b16 %v628
        %v677 = vunpack.c.h.b16 %v628
        %v678 = vunpack.c.l.b16 %v629
        %v679 = vunpack.c.h.b16 %v629
        %v680 = vunpack.c.l.b16 %v630
        %v681 = vunpack.c.h.b16 %v630
        %v682 = vunpack.c.l.b16 %v631
        %v683 = vunpack.c.h.b16 %v631
        %v684 = vunpack.c.l.b16 %v632
        %v685 = vunpack.c.h.b16 %v632
        %v686 = vunpack.c.l.b16 %v633
        %v687 = vunpack.c.h.b16 %v633
        %v688 = vunpack.c.l.b16 %v634
        %v689 = vunpack.c.h.b16 %v634
        %v690 = vunpack.c.l.b16 %v635
        %v691 = vunpack.c.h.b16 %v635
        %v692 = vunpack.c.l.b16 %v636
        %v693 = vunpack.c.h.b16 %v636
        %v694 = vunpack.c.l.b16 %v637
        %v695 = vunpack.c.h.b16 %v637
        %v696 = vunpack.c.l.b16 %v638
        %v697 = vunpack.c.h.b16 %v638
        %v698 = vunpack.c.l.b16 %v639
        %v699 = vunpack.c.h.b16 %v639
        %v700 = vunpack.c.l.b16 %v640
        %v701 = vunpack.c.h.b16 %v640
        %v702 = vunpack.c.l.b16 %v641
        %v703 = vunpack.c.h.b16 %v641
        %v704 = vunpack.c.l.b16 %v642
        %v705 = vunpack.c.h.b16 %v642
        %v706 = vunpack.c.l.b16 %v643
        %v707 = vunpack.c.h.b16 %v643
        %v708 = vpack.c.b16 %v678, %v676
        %v709 = vpack.c.b16 %v679, %v677
        %v710 = vpack.c.b16 %v682, %v680
        %v711 = vpack.c.b16 %v683, %v681
        %v712 = vpack.c.b16 %v686, %v684
        %v713 = vpack.c.b16 %v687, %v685
        %v714 = vpack.c.b16 %v690, %v688
        %v715 = vpack.c.b16 %v691, %v689
        %v716 = vpack.c.b16 %v694, %v692
        %v717 = vpack.c.b16 %v695, %v693
        %v718 = vpack.c.b16 %v698, %v696
        %v719 = vpack.c.b16 %v699, %v697
        %v720 = vpack.c.b16 %v702, %v700
        %v721 = vpack.c.b16 %v703, %v701
        %v722 = vpack.c.b16 %v706, %v704
        %v723 = vpack.c.b16 %v707, %v705
        %740 = vmatprep.subr.bf16.mxu0 0
        %741 = vmatpush1.bf16.msra.mxu0 %v644
        %742 = vmatprep.subr.bf16.mxu0 0
        %743 = vmatpush1.bf16.msra.mxu0 %v645
        %744 = vmatprep.subr.bf16.mxu0 0
        %745 = vmatpush1.bf16.msra.mxu0 %v646
        %746 = vmatprep.subr.bf16.mxu0 0
        %747 = vmatpush1.bf16.msra.mxu0 %v647
        %748 = vmatprep.subr.bf16.mxu0 0
        %749 = vmatpush1.bf16.msra.mxu0 %v648
        %750 = vmatprep.subr.bf16.mxu0 0
        %751 = vmatpush1.bf16.msra.mxu0 %v649
        %752 = vmatprep.subr.bf16.mxu0 0
        %753 = vmatpush1.bf16.msra.mxu0 %v650
        %754 = vmatprep.subr.bf16.mxu0 0
        %755 = vmatpush1.bf16.msra.mxu0 %v651
        %756 = vmatprep.subr.bf16.mxu0 0
        %757 = vmatpush1.bf16.msra.mxu0 %v652
        %758 = vmatprep.subr.bf16.mxu0 0
        %759 = vmatpush1.bf16.msra.mxu0 %v653
        %760 = vmatprep.subr.bf16.mxu0 0
        %761 = vmatpush1.bf16.msra.mxu0 %v654
        %762 = vmatprep.subr.bf16.mxu0 0
        %763 = vmatpush1.bf16.msra.mxu0 %v655
        %764 = vmatprep.subr.bf16.mxu0 0
        %765 = vmatpush1.bf16.msra.mxu0 %v656
        %766 = vmatprep.subr.bf16.mxu0 0
        %767 = vmatpush1.bf16.msra.mxu0 %v657
        %768 = vmatprep.subr.bf16.mxu0 0
        %769 = vmatpush1.bf16.msra.mxu0 %v658
        %770 = vmatprep.subr.bf16.mxu0 0
        %771 = vmatpush1.bf16.msra.mxu0 %v659
        %772 = vmatprep.mubr.bf16.mxu0 %v709
        %773 = vmatmul.mubr.bf16.gmra.mrb[0].mxu0 %v708
        %v774 = vpop.f32.mrb[0].mxu0
        %v775 = vadd.f32 0.0, %v774
        %v776 = vpop.f32.mrb[0].mxu0
        %v777 = vpop.f32.mrb[0].mxu0
        %v778 = vadd.f32 0.0, %v777
        %v779 = vpop.f32.mrb[0].mxu0
        %780 = vmatprep.mubr.bf16.mxu0 %v711
        %781 = vmatmul.mubr.bf16.gmra.mrb[0].mxu0 %v710
        %v782 = vpop.f32.mrb[0].mxu0
        %v783 = vadd.f32 0.0, %v782
        %v784 = vpop.f32.mrb[0].mxu0
        %v785 = vpop.f32.mrb[0].mxu0
        %v786 = vadd.f32 0.0, %v785
        %v787 = vpop.f32.mrb[0].mxu0
        %788 = vmatprep.mubr.bf16.mxu0 %v713
        %789 = vmatmul.mubr.bf16.gmra.mrb[0].mxu0 %v712
        %v790 = vpop.f32.mrb[0].mxu0
        %v791 = vadd.f32 0.0, %v790
        %v792 = vpop.f32.mrb[0].mxu0
        %v793 = vpop.f32.mrb[0].mxu0
        %v794 = vadd.f32 0.0, %v793
        %v795 = vpop.f32.mrb[0].mxu0
        %796 = vmatprep.mubr.bf16.mxu0 %v715
        %797 = vmatmul.mubr.bf16.gmra.mrb[0].mxu0 %v714
        %v798 = vpop.f32.mrb[0].mxu0
        %v799 = vadd.f32 0.0, %v798
        %v800 = vpop.f32.mrb[0].mxu0
        %v801 = vpop.f32.mrb[0].mxu0
        %v802 = vadd.f32 0.0, %v801
        %v803 = vpop.f32.mrb[0].mxu0
        %804 = vmatprep.mubr.bf16.mxu0 %v717
        %805 = vmatmul.mubr.bf16.gmra.mrb[0].mxu0 %v716
        %v806 = vpop.f32.mrb[0].mxu0
        %v807 = vadd.f32 0.0, %v806
        %v808 = vpop.f32.mrb[0].mxu0
        %v809 = vpop.f32.mrb[0].mxu0
        %v810 = vadd.f32 0.0, %v809
        %v811 = vpop.f32.mrb[0].mxu0
        %812 = vmatprep.mubr.bf16.mxu0 %v719
        %813 = vmatmul.mubr.bf16.gmra.mrb[0].mxu0 %v718
        %v814 = vpop.f32.mrb[0].mxu0
        %v815 = vadd.f32 0.0, %v814
        %v816 = vpop.f32.mrb[0].mxu0
        %v817 = vpop.f32.mrb[0].mxu0
        %v818 = vadd.f32 0.0, %v817
        %v819 = vpop.f32.mrb[0].mxu0
        %820 = vmatprep.mubr.bf16.mxu0 %v721
        %821 = vmatmul.mubr.bf16.gmra.mrb[0].mxu0 %v720
        %v822 = vpop.f32.mrb[0].mxu0
        %v823 = vadd.f32 0.0, %v822
        %v824 = vpop.f32.mrb[0].mxu0
        %v825 = vpop.f32.mrb[0].mxu0
        %v826 = vadd.f32 0.0, %v825
        %v827 = vpop.f32.mrb[0].mxu0
        %828 = vmatprep.mubr.bf16.mxu0 %v723
        %829 = vmatmul.mubr.bf16.gmra.mrb[0].mxu0 %v722
        %v830 = vpop.f32.mrb[0].mxu0
        %v831 = vadd.f32 0.0, %v830
        %v832 = vpop.f32.mrb[0].mxu0
        %v833 = vpop.f32.mrb[0].mxu0
        %v834 = vadd.f32 0.0, %v833
        %v835 = vpop.f32.mrb[0].mxu0
        %836 = vdwg.mxu0
        %p837 = scmp.eq.s32.totalorder %s27, 0
        // Predicated region
        $region49: #{tpu_custom_call.1} parent=35 // pred_check
          %p838 = pneg %p837
        $region50: #{tpu_custom_call.1} parent=35 // pred_check_branch
          %840 = sbr.rel (%p838) target = $region52
        $region51: #{tpu_custom_call.1} parent=35 // pred_region
          %v841 = vld [vmem:[%s3] sm:$0x1]
          %v843 = vlaneseq
          %v844 = vshrl.u32 %v843, 7
          %v845 = vsub.s32 0, %v844
          %v846 = vrot.slane %v841, %v845
          %v848 = vadd.f32 %v775, %v846
          %v849 = vadd.f32 %v778, %v846
          %v850 = vadd.f32 %v783, %v846
          %v851 = vadd.f32 %v786, %v846
          %v852 = vadd.f32 %v791, %v846
          %v853 = vadd.f32 %v794, %v846
          %v854 = vadd.f32 %v799, %v846
          %v855 = vadd.f32 %v802, %v846
          %v856 = vadd.f32 %v807, %v846
          %v857 = vadd.f32 %v810, %v846
          %v858 = vadd.f32 %v815, %v846
          %v859 = vadd.f32 %v818, %v846
          %v860 = vadd.f32 %v823, %v846
          %v861 = vadd.f32 %v826, %v846
          %v862 = vadd.f32 %v831, %v846
          %v863 = vadd.f32 %v834, %v846
          %864 = vst [vmem:[%s269] sm:$0xff] %v848
          %865 = vst [vmem:[%s269 + $0x8] sm:$0xff] %v849
          %866 = vst [vmem:[%s269 + $0x10] sm:$0xff] %v850
          %867 = vst [vmem:[%s269 + $0x18] sm:$0xff] %v851
          %868 = vst [vmem:[%s269 + $0x20] sm:$0xff] %v852
          %869 = vst [vmem:[%s269 + $0x28] sm:$0xff] %v853
          %870 = vst [vmem:[%s269 + $0x30] sm:$0xff] %v854
          %871 = vst [vmem:[%s269 + $0x38] sm:$0xff] %v855
          %872 = vst [vmem:[%s269 + $0x40] sm:$0xff] %v856
          %873 = vst [vmem:[%s269 + $0x48] sm:$0xff] %v857
          %874 = vst [vmem:[%s269 + $0x50] sm:$0xff] %v858
          %875 = vst [vmem:[%s269 + $0x58] sm:$0xff] %v859
          %876 = vst [vmem:[%s269 + $0x60] sm:$0xff] %v860
          %877 = vst [vmem:[%s269 + $0x68] sm:$0xff] %v861
          %878 = vst [vmem:[%s269 + $0x70] sm:$0xff] %v862
          %879 = vst [vmem:[%s269 + $0x78] sm:$0xff] %v863
        $region52: #{tpu_custom_call.1} parent=35 // pred_fallthru
          _
        %p880 = scmp.gt.s32.totalorder %s27, 0
        // Predicated region
        $region53: #{tpu_custom_call.1} parent=35 // pred_check
          %p881 = pneg %p880
        $region54: #{tpu_custom_call.1} parent=35 // pred_check_branch
          %883 = sbr.rel (%p881) target = $region56
        $region55: #{tpu_custom_call.1} parent=35 // pred_region
          %v884 = vld [vmem:[%s269] sm:$0xff]
          %v885 = vld [vmem:[%s269 + $0x8] sm:$0xff]
          %v886 = vld [vmem:[%s269 + $0x10] sm:$0xff]
          %v887 = vld [vmem:[%s269 + $0x18] sm:$0xff]
          %v888 = vld [vmem:[%s269 + $0x20] sm:$0xff]
          %v889 = vld [vmem:[%s269 + $0x28] sm:$0xff]
          %v890 = vld [vmem:[%s269 + $0x30] sm:$0xff]
          %v891 = vld [vmem:[%s269 + $0x38] sm:$0xff]
          %v892 = vld [vmem:[%s269 + $0x40] sm:$0xff]
          %v893 = vld [vmem:[%s269 + $0x48] sm:$0xff]
          %v894 = vld [vmem:[%s269 + $0x50] sm:$0xff]
          %v895 = vld [vmem:[%s269 + $0x58] sm:$0xff]
          %v896 = vld [vmem:[%s269 + $0x60] sm:$0xff]
          %v897 = vld [vmem:[%s269 + $0x68] sm:$0xff]
          %v898 = vld [vmem:[%s269 + $0x70] sm:$0xff]
          %v899 = vld [vmem:[%s269 + $0x78] sm:$0xff]
          %v900 = vadd.f32 %v884, %v775
          %v901 = vadd.f32 %v885, %v778
          %v902 = vadd.f32 %v886, %v783
          %v903 = vadd.f32 %v887, %v786
          %v904 = vadd.f32 %v888, %v791
          %v905 = vadd.f32 %v889, %v794
          %v906 = vadd.f32 %v890, %v799
          %v907 = vadd.f32 %v891, %v802
          %v908 = vadd.f32 %v892, %v807
          %v909 = vadd.f32 %v893, %v810
          %v910 = vadd.f32 %v894, %v815
          %v911 = vadd.f32 %v895, %v818
          %v912 = vadd.f32 %v896, %v823
          %v913 = vadd.f32 %v897, %v826
          %v914 = vadd.f32 %v898, %v831
          %v915 = vadd.f32 %v899, %v834
          %916 = vst [vmem:[%s269] sm:$0xff] %v900
          %917 = vst [vmem:[%s269 + $0x8] sm:$0xff] %v901
          %918 = vst [vmem:[%s269 + $0x10] sm:$0xff] %v902
          %919 = vst [vmem:[%s269 + $0x18] sm:$0xff] %v903
          %920 = vst [vmem:[%s269 + $0x20] sm:$0xff] %v904
          %921 = vst [vmem:[%s269 + $0x28] sm:$0xff] %v905
          %922 = vst [vmem:[%s269 + $0x30] sm:$0xff] %v906
          %923 = vst [vmem:[%s269 + $0x38] sm:$0xff] %v907
          %924 = vst [vmem:[%s269 + $0x40] sm:$0xff] %v908
          %925 = vst [vmem:[%s269 + $0x48] sm:$0xff] %v909
          %926 = vst [vmem:[%s269 + $0x50] sm:$0xff] %v910
          %927 = vst [vmem:[%s269 + $0x58] sm:$0xff] %v911
          %928 = vst [vmem:[%s269 + $0x60] sm:$0xff] %v912
          %929 = vst [vmem:[%s269 + $0x68] sm:$0xff] %v913
          %930 = vst [vmem:[%s269 + $0x70] sm:$0xff] %v914
          %931 = vst [vmem:[%s269 + $0x78] sm:$0xff] %v915
        $region56: #{tpu_custom_call.1} parent=35 // pred_fallthru
          _
        %s932 = sand.u32 %s138, 1
        %s933 = scalar_lea.sflag [#allocation4], %s932
        %s934 = sand.u32 %s138, 1
        %s935 = smul.addr %s934, 128
        %s936 = scalar_lea.vmem [#allocation8], %s935
        // Predicated region
        $region57: #{tpu_custom_call.1} parent=35 // pred_check
          %p937 = pneg %p148
        $region58: #{tpu_custom_call.1} parent=35 // pred_check_branch
          %939 = sbr.rel (%p937) target = $region60
        $region59: #{tpu_custom_call.1} parent=35 // pred_region
          %s940 = smul.u32 16, %s26
          %s942 = ssub.s32 2048, 2048
          %943 = vsyncadd %s933, %s942
          %s944 = smul.addr %s940, 128
          %s945 = scalar_lea.hbm %s4, %s944
          %s946 = sshll.u32 %s936, 4
          %s947 = int_to_ptr.vmem [resolvable:$true] %s946
          %952 = dma.vmem_to_hbm [thread:$0]  %s947, 2048, %s945, %s933, 128, 128, 8
        $region60: #{tpu_custom_call.1} parent=35 // pred_fallthru
          _
      $region36: #{tpu_custom_call.1} parent=5 // pred_fallthru
        _
      %p953 = scmp.le.s32.totalorder 2, %s17
      // Predicated region
      $region61: #{tpu_custom_call.1} parent=5 // pred_check
        %p954 = pneg %p953
      $region62: #{tpu_custom_call.1} parent=5 // pred_check_branch
        %956 = sbr.rel (%p954) target = $region64
      $region63: #{tpu_custom_call.1} parent=5 // pred_region
        %s957 = ssub.s32 %s17, 2
        // Predicated region
        $region65: #{tpu_custom_call.1} parent=63 // pred_check
          %p958 = pneg %p154
        $region66: #{tpu_custom_call.1} parent=63 // pred_check_branch
          %960 = sbr.rel (%p958) target = $region68
        $region67: #{tpu_custom_call.1} parent=63 // pred_region
          %s961 = sand.u32 %s139, 1
          %s962 = scalar_lea.sflag [#allocation4], %s961
          %s963 = sand.u32 %s139, 1
          %s964 = smul.addr %s963, 128
          %s965 = scalar_lea.vmem [#allocation8], %s964
          %966 = dma.done %s962, 2048
        $region68: #{tpu_custom_call.1} parent=63 // pred_fallthru
          _
      $region64: #{tpu_custom_call.1} parent=5 // pred_fallthru
        _
    $region6: #{tpu_custom_call.1} parent=1 // loop_footer
      %s21 = sadd.s32 1, %s17
    $region7: #{tpu_custom_call.1} parent=1 // loop_footer_branch
      %16 = sbr.rel target = $region3
    $region8: #{tpu_custom_call.1} parent=1 // loop_exit
      _
    %967 = vsyncpa [#allocation3], 1
    %s968 = scalar_lea.sflag [#allocation3], 1
    %969 = vsyncpa %s968, 1
    %970 = vsyncpa [#allocation6], 1
    %971 = vsyncpa [#allocation4], 1
    %s972 = scalar_lea.sflag [#allocation4], 1
    %973 = vsyncpa %s972, 1

</llo_original>
